<compile_context>
chip_gen: v5e
topology: v5e:2x2
jax: 0.10.0
libtpu: 0.0.40
codegen_flags: <defaults>
</compile_context>

<pallas_src>
import functools

import jax
import jax.numpy as jnp
from jax import lax
from jax.experimental import pallas as pl
from jax.experimental.pallas import tpu as pltpu


def _attention_kernel(q_ref, kt_ref, v_ref, o_ref,
                      q_sc, m_sc, l_sc, acc_sc, *,
                      scale, lk_total, tk, mask_kv):
    """One (batch-tile, q-tile) block; kv axis (grid axis 2) is the reduction."""
    kv = pl.program_id(2)

    @pl.when(kv == 0)
    def _init():
        # Hoist Q scaling out of the kv loop (same Q tile for every kv step).
        q_sc[...] = q_ref[...] * scale
        m_sc[...] = jnp.full_like(m_sc, -jnp.inf)
        l_sc[...] = jnp.zeros_like(l_sc)
        acc_sc[...] = jnp.zeros_like(acc_sc)

    q = q_sc[...]          # (tb, tq, C)   compute dtype (bf16 when input f32)
    kt = kt_ref[...]       # (tb, C, tk)   K pre-transposed -> lane-dense tile
    v = v_ref[...]         # (tb, tk, Cv)

    # Scores (tb, tq, tk): MXU matmul, native-dtype operands, f32 accumulation.
    s = jnp.einsum("bqc,bck->bqk", q, kt, preferred_element_type=jnp.float32)

    if mask_kv:
        # Only the last kv block can be padded; pay the iota/compare/select
        # only there instead of on every kv step.
        def _mask_last(sv):
            col = lax.broadcasted_iota(jnp.int32, sv.shape, 2) + kv * tk
            return jnp.where(col < lk_total, sv, -1e30)

        s = lax.cond(kv == pl.num_programs(2) - 1, _mask_last, lambda sv: sv, s)

    # Online (flash) softmax update, element-wise math in f32.
    # m/l are lane-replicated (width 128) so their loads/stores stay in native
    # vreg layout (no masked single-lane accesses per kv step).
    m_prev = m_sc[...]                                   # (tb, tq, 128)
    l_prev = l_sc[...]                                   # (tb, tq, 128)
    m_curr = jnp.max(s, axis=-1, keepdims=True)          # (tb, tq, 1)
    m_next = jnp.maximum(m_prev, m_curr)                 # (tb, tq, 128)
    alpha = jnp.exp(m_prev - m_next)                     # (tb, tq, 128)
    p = jnp.exp(s - m_next[:, :, :1])                    # (tb, tq, tk), f32

    l_sc[...] = alpha * l_prev + jnp.sum(p, axis=-1, keepdims=True)
    m_sc[...] = m_next
    acc_sc[...] = acc_sc[...] * alpha[:, :, :1] + jnp.einsum(
        "bqk,bkc->bqc", p.astype(v.dtype), v,
        preferred_element_type=jnp.float32)

    @pl.when(kv == pl.num_programs(2) - 1)
    def _finalize():
        inv_l = pl.reciprocal(l_sc[...], approx=True)    # EUP slot (~free)
        o_ref[...] = (acc_sc[...] * inv_l[:, :, :1]).astype(o_ref.dtype)


def attention(queries, keys, values, *, in_channels,
              block_b=2, block_q=256, block_k=1024, use_bf16_mxu=True):
    """Pallas equivalent of Attention.forward(queries, keys, values)."""
    B, Lq, C = queries.shape
    Bk, Lk, Ck = keys.shape
    Bv, Lkv, Cv = values.shape
    assert (Bk, Ck) == (B, C) and (Bv, Lkv) == (B, Lk)

    out_dtype = queries.dtype
    scale = 1.0 / (in_channels ** 0.5)

    # bf16 MXU operands when inputs are f32 (f32xf32 MXU is multi-pass and
    # much slower, esp. on v5e); also halves HBM/DMA/VMEM traffic.
    compute_dtype = out_dtype
    if use_bf16_mxu and out_dtype == jnp.float32:
        compute_dtype = jnp.bfloat16

    q_in = queries.astype(compute_dtype)
    kt_in = jnp.swapaxes(keys, 1, 2).astype(compute_dtype)   # (B, C, Lk)
    v_in = values.astype(compute_dtype)

    c_item = jnp.dtype(compute_dtype).itemsize
    o_item = jnp.dtype(out_dtype).itemsize

    # Tile sizes: favor large tk (fewer flash bookkeeping steps) and tq (fewer
    # K/V re-reads) over tb; clamp to the problem and the VMEM budget.
    tb = max(1, min(block_b, B))
    tq = min(block_q, Lq)
    tk = min(block_k, Lk)

    def vmem_est(tb_, tq_, tk_):
        dbl = 2  # Pallas double-buffers pipelined operands
        io = dbl * (tb_ * tq_ * C * c_item        # Q
                    + tb_ * C * tk_ * c_item      # K^T
                    + tb_ * tk_ * Cv * c_item     # V
                    + tb_ * tq_ * Cv * o_item)    # O
        scr = tb_ * tq_ * (2 * 128 + Cv) * 4 + tb_ * tq_ * C * c_item
        tmp = 3 * tb_ * tq_ * tk_ * 4             # s, p (f32) + headroom
        return io + scr + tmp

    try:
        vmem_cap = int(pltpu.get_tpu_info().vmem_capacity_bytes)
    except Exception:
        vmem_cap = 64 * 1024 * 1024               # v7x (smallest) per-core VMEM
    vmem_budget = min(vmem_cap * 7 // 10, 80 * 1024 * 1024)

    while vmem_est(tb, tq, tk) > vmem_budget:
        if tk >= 256 and tk % 256 == 0:
            tk //= 2                              # halves stay multiples of 128
        elif tq >= 16 and tq % 16 == 0:
            tq //= 2                              # halves stay multiples of 8
        elif tb > 1:
            tb = (tb + 1) // 2
        else:
            break

    # Megacore (2 TCs on v7x): keep >=2 units of 'parallel' grid work.
    if B >= 2 and pl.cdiv(B, tb) * pl.cdiv(Lq, tq) < 2:
        tb = (B + 1) // 2

    grid = (pl.cdiv(B, tb), pl.cdiv(Lq, tq), pl.cdiv(Lk, tk))
    mask_kv = (Lk % tk) != 0

    vmem_limit = int(min(max(vmem_est(tb, tq, tk) * 3 // 2 + (4 << 20),
                             32 * 1024 * 1024),
                         vmem_cap * 4 // 5))

    kernel = functools.partial(
        _attention_kernel, scale=scale, lk_total=Lk, tk=tk, mask_kv=mask_kv)

    n_q_tiles = pl.cdiv(Lq, tq)
    cost = pl.CostEstimate(
        flops=4 * B * Lq * Lk * C,                     # QK^T + PV, 2 flops/MAC
        transcendentals=B * Lq * Lk,                   # exp in softmax
        bytes_accessed=(c_item * B * Lq * C                         # Q once
                        + c_item * n_q_tiles * B * Lk * (C + Cv)    # K/V re-read
                        + o_item * B * Lq * Cv))                    # O once

    return pl.pallas_call(
        kernel,
        out_shape=jax.ShapeDtypeStruct((B, Lq, Cv), out_dtype),
        grid_spec=pltpu.PrefetchScalarGridSpec(
            num_scalar_prefetch=0,
            grid=grid,
            in_specs=[
                pl.BlockSpec((tb, tq, C), lambda b, q, k: (b, q, 0)),
                pl.BlockSpec((tb, C, tk), lambda b, q, k: (b, 0, k)),
                pl.BlockSpec((tb, tk, Cv), lambda b, q, k: (b, k, 0)),
            ],
            out_specs=pl.BlockSpec((tb, tq, Cv), lambda b, q, k: (b, q, 0)),
            scratch_shapes=[
                pltpu.VMEM((tb, tq, C), compute_dtype),   # scaled Q (hoisted)
                pltpu.VMEM((tb, tq, 128), jnp.float32),   # running max (lane-repl.)
                pltpu.VMEM((tb, tq, 128), jnp.float32),   # running sum (lane-repl.)
                pltpu.VMEM((tb, tq, Cv), jnp.float32),    # output accumulator
            ],
        ),
        compiler_params=pltpu.CompilerParams(
            dimension_semantics=("parallel", "parallel", "arbitrary"),
            vmem_limit_bytes=vmem_limit,
        ),
        cost_estimate=cost,
    )(q_in, kt_in, v_in)


def _reference(queries, keys, values, in_channels):
    s = jnp.einsum("bqc,bkc->bqk", queries, keys) / (in_channels ** 0.5)
    p = jax.nn.softmax(s, axis=-1)
    return jnp.einsum("bqk,bkc->bqc", p, values)


if __name__ == "__main__":
    # Module config: Attention(in_channels=32, heads=4, dropout=None)
    in_channels = 32
    heads = 4
    assert in_channels % heads == 0
    B, Lq, Lk = 2, 8, 8

    key = jax.random.PRNGKey(0)
    kq, kk, kvk = jax.random.split(key, 3)
    queries = jax.random.normal(kq, (B, Lq, in_channels), dtype=jnp.float32)
    keys = jax.random.normal(kk, (B, Lq if False else Lk, in_channels),
                             dtype=jnp.float32)
    values = jax.random.normal(kvk, (B, Lk, in_channels), dtype=jnp.float32)

    out = attention(queries, keys, values, in_channels=in_channels)
    out = jax.block_until_ready(out)

    ref = _reference(queries, keys, values, in_channels)
    assert out.shape == (B, Lq, in_channels)
    # bf16 MXU operands (intentional, per perf review) + approx reciprocal
    # loosen the tolerance vs the pure-f32 reference (~1e-2 relative expected).
    assert jnp.allclose(out, ref, atol=3e-2, rtol=3e-2), "mismatch vs reference"

    print("KERNEL_OK")
</pallas_src>

<mosaic_0001>
module attributes {stable_mosaic.version = 11 : i64} {
  func.func @_attention_kernel(%arg0: i32, %arg1: i32, %arg2: i32, %arg3: memref<1x8x32xbf16, #tpu.memory_space<vmem>>, %arg4: memref<1x32x8xbf16, #tpu.memory_space<vmem>>, %arg5: memref<1x8x32xbf16, #tpu.memory_space<vmem>>, %arg6: memref<1x8x32xf32, #tpu.memory_space<vmem>>, %arg7: memref<1x8x32xbf16, #tpu.memory_space<vmem>>, %arg8: memref<1x8x128xf32, #tpu.memory_space<vmem>>, %arg9: memref<1x8x128xf32, #tpu.memory_space<vmem>>, %arg10: memref<1x8x32xf32, #tpu.memory_space<vmem>>) attributes {dimension_semantics = [#tpu.dimension_semantics<parallel>, #tpu.dimension_semantics<parallel>, #tpu.dimension_semantics<arbitrary>], iteration_bounds = array<i64: 2, 1, 1>, scalar_prefetch = 0 : i64, scratch_operands = 4 : i64, tpu.core_type = #tpu.core_type<tc>, window_params = [{transform_indices = @transform_0, window_bounds = array<i64: 1, 8, 32>}, {transform_indices = @transform_1, window_bounds = array<i64: 1, 32, 8>}, {transform_indices = @transform_2, window_bounds = array<i64: 1, 8, 32>}, {transform_indices = @transform_3, window_bounds = array<i64: 1, 8, 32>}]} {
    %c0_i32 = arith.constant 0 : i32
    %0 = arith.cmpi eq, %arg2, %c0_i32 : i32
    %1 = arith.extui %0 : i1 to i32
    %c0_i32_0 = arith.constant 0 : i32
    %2 = arith.cmpi ne, %1, %c0_i32_0 : i32
    scf.if %2 {
      %c0_32 = arith.constant 0 : index
      %c0_33 = arith.constant 0 : index
      %c0_34 = arith.constant 0 : index
      %37 = vector.load %arg3[%c0_32, %c0_33, %c0_34] : memref<1x8x32xbf16, #tpu.memory_space<vmem>>, vector<1x8x32xbf16>
      %cst_35 = arith.constant 1.767580e-01 : bf16
      %38 = vector.broadcast %cst_35 : bf16 to vector<1x8x32xbf16>
      %39 = arith.mulf %37, %38 : vector<1x8x32xbf16>
      %c0_36 = arith.constant 0 : index
      %c0_37 = arith.constant 0 : index
      %c0_38 = arith.constant 0 : index
      %40 = vector.load %arg7[%c0_36, %c0_37, %c0_38] : memref<1x8x32xbf16, #tpu.memory_space<vmem>>, vector<1x8x32xbf16>
      tpu.vector_store %arg7[%c0_36, %c0_37, %c0_38], %39 {strides = array<i32>} : memref<1x8x32xbf16, #tpu.memory_space<vmem>>, vector<1x8x32xbf16>,
      %cst_39 = arith.constant 0xFF800000 : f32
      %41 = vector.broadcast %cst_39 : f32 to vector<1x8x128xf32>
      %c0_40 = arith.constant 0 : index
      %c0_41 = arith.constant 0 : index
      %c0_42 = arith.constant 0 : index
      %42 = vector.load %arg8[%c0_40, %c0_41, %c0_42] : memref<1x8x128xf32, #tpu.memory_space<vmem>>, vector<1x8x128xf32>
      tpu.vector_store %arg8[%c0_40, %c0_41, %c0_42], %41 {strides = array<i32>} : memref<1x8x128xf32, #tpu.memory_space<vmem>>, vector<1x8x128xf32>,
      %cst_43 = arith.constant 0.000000e+00 : f32
      %43 = vector.broadcast %cst_43 : f32 to vector<1x8x128xf32>
      %c0_44 = arith.constant 0 : index
      %c0_45 = arith.constant 0 : index
      %c0_46 = arith.constant 0 : index
      %44 = vector.load %arg9[%c0_44, %c0_45, %c0_46] : memref<1x8x128xf32, #tpu.memory_space<vmem>>, vector<1x8x128xf32>
      tpu.vector_store %arg9[%c0_44, %c0_45, %c0_46], %43 {strides = array<i32>} : memref<1x8x128xf32, #tpu.memory_space<vmem>>, vector<1x8x128xf32>,
      %cst_47 = arith.constant 0.000000e+00 : f32
      %45 = vector.broadcast %cst_47 : f32 to vector<1x8x32xf32>
      %c0_48 = arith.constant 0 : index
      %c0_49 = arith.constant 0 : index
      %c0_50 = arith.constant 0 : index
      %46 = vector.load %arg10[%c0_48, %c0_49, %c0_50] : memref<1x8x32xf32, #tpu.memory_space<vmem>>, vector<1x8x32xf32>
      tpu.vector_store %arg10[%c0_48, %c0_49, %c0_50], %45 {strides = array<i32>} : memref<1x8x32xf32, #tpu.memory_space<vmem>>, vector<1x8x32xf32>,
    } else {
    }
    %c0 = arith.constant 0 : index
    %c0_1 = arith.constant 0 : index
    %c0_2 = arith.constant 0 : index
    %3 = vector.load %arg7[%c0, %c0_1, %c0_2] : memref<1x8x32xbf16, #tpu.memory_space<vmem>>, vector<1x8x32xbf16>
    %c0_3 = arith.constant 0 : index
    %c0_4 = arith.constant 0 : index
    %c0_5 = arith.constant 0 : index
    %4 = vector.load %arg4[%c0_3, %c0_4, %c0_5] : memref<1x32x8xbf16, #tpu.memory_space<vmem>>, vector<1x32x8xbf16>
    %c0_6 = arith.constant 0 : index
    %c0_7 = arith.constant 0 : index
    %c0_8 = arith.constant 0 : index
    %5 = vector.load %arg5[%c0_6, %c0_7, %c0_8] : memref<1x8x32xbf16, #tpu.memory_space<vmem>>, vector<1x8x32xbf16>
    "tpu.trace_start"() <{level = 10 : i32, message = "bqc,bck->bqk"}> : () -> ()
    %cst = arith.constant dense<0.000000e+00> : vector<1x8x8xf32>
    %6 = tpu.matmul %3, %4, %cst {dimension_numbers = #tpu.dot_dimension_numbers<[2], [1], [1], [2], [0, 0, 0, 1, 1, 2], [0], [0]>} : vector<1x8x32xbf16>, vector<1x32x8xbf16>, vector<1x8x8xf32> -> vector<1x8x8xf32>
    "tpu.trace_stop"() : () -> ()
    %c0_9 = arith.constant 0 : index
    %c0_10 = arith.constant 0 : index
    %c0_11 = arith.constant 0 : index
    %7 = vector.load %arg8[%c0_9, %c0_10, %c0_11] : memref<1x8x128xf32, #tpu.memory_space<vmem>>, vector<1x8x128xf32>
    %c0_12 = arith.constant 0 : index
    %c0_13 = arith.constant 0 : index
    %c0_14 = arith.constant 0 : index
    %8 = vector.load %arg9[%c0_12, %c0_13, %c0_14] : memref<1x8x128xf32, #tpu.memory_space<vmem>>, vector<1x8x128xf32>
    %cst_15 = arith.constant dense<0xFF800000> : vector<1x8xf32>
    %9 = vector.multi_reduction <maximumf>, %6, %cst_15 [2] : vector<1x8x8xf32> to vector<1x8xf32>
    %10 = vector.shape_cast %9 : vector<1x8xf32> to vector<1x8x1xf32>
    %11 = vector.broadcast %10 : vector<1x8x1xf32> to vector<1x8x128xf32>
    %12 = arith.maximumf %7, %11 : vector<1x8x128xf32>
    %13 = arith.subf %7, %12 : vector<1x8x128xf32>
    %14 = math.exp %13 : vector<1x8x128xf32>
    %15 = vector.extract_strided_slice %12 {offsets = [0, 0, 0], sizes = [1, 8, 1], strides = [1, 1, 1]} : vector<1x8x128xf32> to vector<1x8x1xf32>
    %16 = vector.broadcast %15 : vector<1x8x1xf32> to vector<1x8x8xf32>
    %17 = arith.subf %6, %16 : vector<1x8x8xf32>
    %18 = math.exp %17 : vector<1x8x8xf32>
    %19 = arith.mulf %14, %8 : vector<1x8x128xf32>
    %cst_16 = arith.constant dense<0.000000e+00> : vector<1x8xf32>
    %20 = vector.multi_reduction <add>, %18, %cst_16 [2] : vector<1x8x8xf32> to vector<1x8xf32>
    %21 = vector.shape_cast %20 : vector<1x8xf32> to vector<1x8x1xf32>
    %22 = vector.broadcast %21 : vector<1x8x1xf32> to vector<1x8x128xf32>
    %23 = arith.addf %19, %22 : vector<1x8x128xf32>
    %c0_17 = arith.constant 0 : index
    %c0_18 = arith.constant 0 : index
    %c0_19 = arith.constant 0 : index
    %24 = vector.load %arg9[%c0_17, %c0_18, %c0_19] : memref<1x8x128xf32, #tpu.memory_space<vmem>>, vector<1x8x128xf32>
    tpu.vector_store %arg9[%c0_17, %c0_18, %c0_19], %23 {strides = array<i32>} : memref<1x8x128xf32, #tpu.memory_space<vmem>>, vector<1x8x128xf32>,
    %c0_20 = arith.constant 0 : index
    %c0_21 = arith.constant 0 : index
    %c0_22 = arith.constant 0 : index
    %25 = vector.load %arg8[%c0_20, %c0_21, %c0_22] : memref<1x8x128xf32, #tpu.memory_space<vmem>>, vector<1x8x128xf32>
    tpu.vector_store %arg8[%c0_20, %c0_21, %c0_22], %12 {strides = array<i32>} : memref<1x8x128xf32, #tpu.memory_space<vmem>>, vector<1x8x128xf32>,
    %c0_23 = arith.constant 0 : index
    %c0_24 = arith.constant 0 : index
    %c0_25 = arith.constant 0 : index
    %26 = vector.load %arg10[%c0_23, %c0_24, %c0_25] : memref<1x8x32xf32, #tpu.memory_space<vmem>>, vector<1x8x32xf32>
    %27 = vector.extract_strided_slice %14 {offsets = [0, 0, 0], sizes = [1, 8, 1], strides = [1, 1, 1]} : vector<1x8x128xf32> to vector<1x8x1xf32>
    %28 = vector.broadcast %27 : vector<1x8x1xf32> to vector<1x8x32xf32>
    %29 = arith.mulf %26, %28 : vector<1x8x32xf32>
    %30 = arith.truncf %18 : vector<1x8x8xf32> to vector<1x8x8xbf16>
    "tpu.trace_start"() <{level = 10 : i32, message = "bqk,bkc->bqc"}> : () -> ()
    %cst_26 = arith.constant dense<0.000000e+00> : vector<1x8x32xf32>
    %31 = tpu.matmul %30, %5, %cst_26 {dimension_numbers = #tpu.dot_dimension_numbers<[2], [1], [1], [2], [0, 0, 0, 1, 1, 2], [0], [0]>} : vector<1x8x8xbf16>, vector<1x8x32xbf16>, vector<1x8x32xf32> -> vector<1x8x32xf32>
    "tpu.trace_stop"() : () -> ()
    %32 = arith.addf %29, %31 : vector<1x8x32xf32>
    %c0_27 = arith.constant 0 : index
    %c0_28 = arith.constant 0 : index
    %c0_29 = arith.constant 0 : index
    %33 = vector.load %arg10[%c0_27, %c0_28, %c0_29] : memref<1x8x32xf32, #tpu.memory_space<vmem>>, vector<1x8x32xf32>
    tpu.vector_store %arg10[%c0_27, %c0_28, %c0_29], %32 {strides = array<i32>} : memref<1x8x32xf32, #tpu.memory_space<vmem>>, vector<1x8x32xf32>,
    %c0_i32_30 = arith.constant 0 : i32
    %34 = arith.cmpi eq, %arg2, %c0_i32_30 : i32
    %35 = arith.extui %34 : i1 to i32
    %c0_i32_31 = arith.constant 0 : i32
    %36 = arith.cmpi ne, %35, %c0_i32_31 : i32
    scf.if %36 {
      %c0_32 = arith.constant 0 : index
      %c0_33 = arith.constant 0 : index
      %c0_34 = arith.constant 0 : index
      %37 = vector.load %arg9[%c0_32, %c0_33, %c0_34] : memref<1x8x128xf32, #tpu.memory_space<vmem>>, vector<1x8x128xf32>
      %38 = tpu.reciprocal %37 {approx = true} : vector<1x8x128xf32> -> vector<1x8x128xf32>
      %c0_35 = arith.constant 0 : index
      %c0_36 = arith.constant 0 : index
      %c0_37 = arith.constant 0 : index
      %39 = vector.load %arg10[%c0_35, %c0_36, %c0_37] : memref<1x8x32xf32, #tpu.memory_space<vmem>>, vector<1x8x32xf32>
      %40 = vector.extract_strided_slice %38 {offsets = [0, 0, 0], sizes = [1, 8, 1], strides = [1, 1, 1]} : vector<1x8x128xf32> to vector<1x8x1xf32>
      %41 = vector.broadcast %40 : vector<1x8x1xf32> to vector<1x8x32xf32>
      %42 = arith.mulf %39, %41 : vector<1x8x32xf32>
      %c0_38 = arith.constant 0 : index
      %c0_39 = arith.constant 0 : index
      %c0_40 = arith.constant 0 : index
      %43 = vector.load %arg6[%c0_38, %c0_39, %c0_40] : memref<1x8x32xf32, #tpu.memory_space<vmem>>, vector<1x8x32xf32>
      tpu.vector_store %arg6[%c0_38, %c0_39, %c0_40], %42 {strides = array<i32>} : memref<1x8x32xf32, #tpu.memory_space<vmem>>, vector<1x8x32xf32>,
    } else {
    }
    return
  }
  func.func @transform_0(%arg0: i32, %arg1: i32, %arg2: i32) -> (i32, i32, i32) {
    %c0_i32 = arith.constant 0 : i32
    %c0_i32_0 = arith.constant 0 : i32
    return %arg0, %arg1, %c0_i32 : i32, i32, i32
  }
  func.func @transform_1(%arg0: i32, %arg1: i32, %arg2: i32) -> (i32, i32, i32) {
    %c0_i32 = arith.constant 0 : i32
    %c0_i32_0 = arith.constant 0 : i32
    return %arg0, %c0_i32, %arg2 : i32, i32, i32
  }
  func.func @transform_2(%arg0: i32, %arg1: i32, %arg2: i32) -> (i32, i32, i32) {
    %c0_i32 = arith.constant 0 : i32
    %c0_i32_0 = arith.constant 0 : i32
    return %arg0, %arg2, %c0_i32 : i32, i32, i32
  }
  func.func @transform_3(%arg0: i32, %arg1: i32, %arg2: i32) -> (i32, i32, i32) {
    %c0_i32 = arith.constant 0 : i32
    %c0_i32_0 = arith.constant 0 : i32
    return %arg0, %arg1, %c0_i32 : i32, i32, i32
  }
}

</mosaic_0001>

<llo_original>
// kernel: tpu_custom_call.1
$region0: #{tpu_custom_call.1}
  #allocation0 [shape = 'u32[]', space=smem, size = 0x4, offset = 0x4, fixed_abs, tag = 'smem constant byte address 0x4 - core index']
  #allocation1 [shape = 'u32[72,128]{1,0:T(1,128)}', space=vmem, size = 0x9000, scoped, tag = 'internal scratch']
  #allocation2 [shape = 'bf16[1,8,32]{2,1,0:T(8,128)(2,1)}', space=vmem, size = 0x800, scoped, tag = 'scratch operand']
  #allocation3 [shape = 'f32[1,8,128]{2,1,0:T(8,128)}', space=vmem, size = 0x1000, scoped, tag = 'scratch operand']
  #allocation4 [shape = 'f32[1,8,128]{2,1,0:T(8,128)}', space=vmem, size = 0x1000, scoped, tag = 'scratch operand']
  #allocation5 [shape = 'f32[1,8,32]{2,1,0:T(8,128)}', space=vmem, size = 0x1000, scoped, tag = 'scratch operand']
  %s0 = inlined_call_operand.vmem [shape: bf16[2,8,32], index: 0, kind: input, shape index: {}]
  %s1 = inlined_call_operand.vmem [shape: bf16[2,32,8], index: 1, kind: input, shape index: {}]
  %s2 = inlined_call_operand.vmem [shape: bf16[2,8,32], index: 2, kind: input, shape index: {}]
  %s3 = inlined_call_operand.hbm [shape: f32[2,8,32], index: 3, kind: output, shape index: {}]
  %s4 = sld [smem:[#allocation0]]
  $region53: #{tpu_custom_call.1} parent=0
    _
  %s6 = ssub.s32 1, %s4
  %s7 = scalar_select 0, %s6, %s4
  $region1: #{tpu_custom_call.1} parent=0
    #allocation6 [shape = 'u8[8192]{0}', space=vmem, size = 0x2000, scoped, tag = 'output window, operand 0']
    #allocation7 [shape = 's32[2]{0}', space=sflag, size = 0x8, scoped, tag = 'scoped memory for tpu_custom_call.1']
    %8 = vsyncpa [#allocation7], 0
    %s9 = scalar_lea.sflag [#allocation7], 1
    %10 = vsyncpa %s9, 0
    loop: start=0, step=1, limit=4
    $region2: #{tpu_custom_call.1} parent=1 // loop_pre_header
      _
    $region3: #{tpu_custom_call.1} parent=1 // loop_header
      %s12 = sphi 0, %s16
      %p13 = scmp.ge.s32.totalorder %s12, 4
      %s19 = sphi 0, %s38
      %s20 = sphi 0, %s34
      %s21 = sphi 0, %s30
      %s22 = sphi 0, %s19
      %s23 = sphi 0, %s20
      %s24 = sphi 0, %s21
      %s25 = sphi 0, %s22
      %s26 = sphi 0, %s23
      %s27 = sphi 0, %s24
      %s43 = sphi 0, %s45
      %s46 = sphi 0, %s43
      %s47 = sphi 0, %s46
      %s63 = sphi 0, %s47
      %s71 = sphi 0, %s73
      %s74 = sphi 0, %s71
      %s75 = sphi 0, %s74
      %s91 = sphi 0, %s75
      %s99 = sphi 0, %s101
      %s102 = sphi 0, %s99
      %s103 = sphi 0, %s102
      %s119 = sphi 0, %s103
      %s127 = sphi 0, %s129
      %s130 = sphi 0, %s127
      %s131 = sphi 0, %s130
      %s147 = sphi 0, %s131
    $region4: #{tpu_custom_call.1} parent=1 // loop_header_branch
      %15 = sbr.rel (%p13) target = $region8
    $region5: #{tpu_custom_call.1} parent=1 // loop_body
      %s17 = ssub.s32 %s12, 1
      %s18 = ssub.s32 %s12, 2
      %s28 = sadd.s32 1, %s21
      %p29 = scmp.ge.s32.totalorder %s28, 1
      %s30 = scalar_select %p29, 0, %s28
      %s31 = sadd.s32 1, %s20
      %s32 = scalar_select %p29, %s31, %s20
      %p33 = scmp.ge.s32.totalorder %s32, 1
      %s34 = scalar_select %p33, 0, %s32
      %s35 = sadd.s32 1, %s19
      %s36 = scalar_select %p33, %s35, %s19
      %p37 = scmp.ge.s32.totalorder %s36, 2
      %s38 = scalar_select %p37, 0, %s36
      %s39 = ssub.s32 %s19, %s38
      %s40 = ssub.s32 %s20, %s34
      %s41 = sor.u32 %s39, %s40
      %p42 = scmp.eq.s32.totalorder %s41, 0
      %s44 = sadd.s32 %s43, 1
      %s45 = scalar_select %p42, %s43, %s44
      %p48 = pneg %p42
      %p49 = scmp.eq.s32.totalorder %s12, 1
      %p50 = por %p48, %p49
      %p51 = scmp.ne.s32.totalorder %s43, %s46
      %p52 = scmp.eq.s32.totalorder %s12, 0
      %p53 = por %p51, %p52
      %p54 = scmp.ne.s32.totalorder %s43, %s46
      %p55 = scmp.eq.s32.totalorder %s17, 1
      %p56 = por %p54, %p55
      %p57 = scmp.ne.s32.totalorder %s46, %s47
      %p58 = scmp.eq.s32.totalorder %s17, 0
      %p59 = por %p57, %p58
      %p60 = scmp.ne.s32.totalorder %s46, %s47
      %p61 = scmp.eq.s32.totalorder %s18, 1
      %p62 = por %p60, %p61
      %p64 = scmp.ne.s32.totalorder %s47, %s63
      %p65 = scmp.eq.s32.totalorder %s18, 0
      %p66 = por %p64, %p65
      %s67 = ssub.s32 %s19, %s38
      %s68 = ssub.s32 %s21, %s30
      %s69 = sor.u32 %s67, %s68
      %p70 = scmp.eq.s32.totalorder %s69, 0
      %s72 = sadd.s32 %s71, 1
      %s73 = scalar_select %p70, %s71, %s72
      %p76 = pneg %p70
      %p77 = scmp.eq.s32.totalorder %s12, 1
      %p78 = por %p76, %p77
      %p79 = scmp.ne.s32.totalorder %s71, %s74
      %p80 = scmp.eq.s32.totalorder %s12, 0
      %p81 = por %p79, %p80
      %p82 = scmp.ne.s32.totalorder %s71, %s74
      %p83 = scmp.eq.s32.totalorder %s17, 1
      %p84 = por %p82, %p83
      %p85 = scmp.ne.s32.totalorder %s74, %s75
      %p86 = scmp.eq.s32.totalorder %s17, 0
      %p87 = por %p85, %p86
      %p88 = scmp.ne.s32.totalorder %s74, %s75
      %p89 = scmp.eq.s32.totalorder %s18, 1
      %p90 = por %p88, %p89
      %p92 = scmp.ne.s32.totalorder %s75, %s91
      %p93 = scmp.eq.s32.totalorder %s18, 0
      %p94 = por %p92, %p93
      %s95 = ssub.s32 %s19, %s38
      %s96 = ssub.s32 %s21, %s30
      %s97 = sor.u32 %s95, %s96
      %p98 = scmp.eq.s32.totalorder %s97, 0
      %s100 = sadd.s32 %s99, 1
      %s101 = scalar_select %p98, %s99, %s100
      %p104 = pneg %p98
      %p105 = scmp.eq.s32.totalorder %s12, 1
      %p106 = por %p104, %p105
      %p107 = scmp.ne.s32.totalorder %s99, %s102
      %p108 = scmp.eq.s32.totalorder %s12, 0
      %p109 = por %p107, %p108
      %p110 = scmp.ne.s32.totalorder %s99, %s102
      %p111 = scmp.eq.s32.totalorder %s17, 1
      %p112 = por %p110, %p111
      %p113 = scmp.ne.s32.totalorder %s102, %s103
      %p114 = scmp.eq.s32.totalorder %s17, 0
      %p115 = por %p113, %p114
      %p116 = scmp.ne.s32.totalorder %s102, %s103
      %p117 = scmp.eq.s32.totalorder %s18, 1
      %p118 = por %p116, %p117
      %p120 = scmp.ne.s32.totalorder %s103, %s119
      %p121 = scmp.eq.s32.totalorder %s18, 0
      %p122 = por %p120, %p121
      %s123 = ssub.s32 %s19, %s38
      %s124 = ssub.s32 %s20, %s34
      %s125 = sor.u32 %s123, %s124
      %p126 = scmp.eq.s32.totalorder %s125, 0
      %s128 = sadd.s32 %s127, 1
      %s129 = scalar_select %p126, %s127, %s128
      %p132 = pneg %p126
      %p133 = scmp.eq.s32.totalorder %s12, 1
      %p134 = por %p132, %p133
      %p135 = scmp.ne.s32.totalorder %s127, %s130
      %p136 = scmp.eq.s32.totalorder %s12, 0
      %p137 = por %p135, %p136
      %p138 = scmp.ne.s32.totalorder %s127, %s130
      %p139 = scmp.eq.s32.totalorder %s17, 1
      %p140 = por %p138, %p139
      %p141 = scmp.ne.s32.totalorder %s130, %s131
      %p142 = scmp.eq.s32.totalorder %s17, 0
      %p143 = por %p141, %p142
      %p144 = scmp.ne.s32.totalorder %s130, %s131
      %p145 = scmp.eq.s32.totalorder %s18, 1
      %p146 = por %p144, %p145
      %p148 = scmp.ne.s32.totalorder %s131, %s147
      %p149 = scmp.eq.s32.totalorder %s18, 0
      %p150 = por %p148, %p149
      %p151 = scmp.le.s32.totalorder 1, %s12
      %p152 = scmp.lt.s32.totalorder %s12, 3
      %p153 = pnand %p151, %p152
      %p154 = pneg %p153
      // Predicated region
      $region9: #{tpu_custom_call.1} parent=5 // pred_check
        _
      $region10: #{tpu_custom_call.1} parent=5 // pred_check_branch
        %156 = sbr.rel (%p153) target = $region12
      $region11: #{tpu_custom_call.1} parent=5 // pred_region
        %s157 = ssub.s32 %s12, 1
      $region12: #{tpu_custom_call.1} parent=5 // pred_fallthru
        _
      %p158 = scmp.lt.s32.totalorder %s12, 2
      // Predicated region
      $region13: #{tpu_custom_call.1} parent=5 // pred_check
        %p159 = pneg %p158
      $region14: #{tpu_custom_call.1} parent=5 // pred_check_branch
        %161 = sbr.rel (%p159) target = $region16
      $region15: #{tpu_custom_call.1} parent=5 // pred_region
        // Predicated region
        $region17: #{tpu_custom_call.1} parent=15 // pred_check
          %p162 = pneg %p53
        $region18: #{tpu_custom_call.1} parent=15 // pred_check_branch
          %164 = sbr.rel (%p162) target = $region20
        $region19: #{tpu_custom_call.1} parent=15 // pred_region
          %p165 = scmp.lt.s32.totalorder %s19, 1
          %s166 = scalar_select %p165, %s19, 1
          %p167 = scmp.lt.s32.totalorder %s20, 0
          %s168 = scalar_select %p167, %s20, 0
          %s169 = sadd.s32 %s168, %s166
          %s170 = smul.addr %s169, 4
          %s171 = scalar_lea.vmem %s0, %s170
        $region20: #{tpu_custom_call.1} parent=15 // pred_fallthru
          _
        // Predicated region
        $region21: #{tpu_custom_call.1} parent=15 // pred_check
          %p172 = pneg %p81
        $region22: #{tpu_custom_call.1} parent=15 // pred_check_branch
          %174 = sbr.rel (%p172) target = $region24
        $region23: #{tpu_custom_call.1} parent=15 // pred_region
          %p175 = scmp.lt.s32.totalorder %s19, 1
          %s176 = scalar_select %p175, %s19, 1
          %p177 = scmp.lt.s32.totalorder %s21, 0
          %s178 = scalar_select %p177, %s21, 0
          %s179 = smul.addr %s176, 4
          %s180 = sadd.s32 %s178, %s179
          %s181 = smul.addr %s180, 4
          %s182 = scalar_lea.vmem %s1, %s181
        $region24: #{tpu_custom_call.1} parent=15 // pred_fallthru
          _
        // Predicated region
        $region25: #{tpu_custom_call.1} parent=15 // pred_check
          %p183 = pneg %p109
        $region26: #{tpu_custom_call.1} parent=15 // pred_check_branch
          %185 = sbr.rel (%p183) target = $region28
        $region27: #{tpu_custom_call.1} parent=15 // pred_region
          %p186 = scmp.lt.s32.totalorder %s19, 1
          %s187 = scalar_select %p186, %s19, 1
          %p188 = scmp.lt.s32.totalorder %s21, 0
          %s189 = scalar_select %p188, %s21, 0
          %s190 = sadd.s32 %s189, %s187
          %s191 = smul.addr %s190, 4
          %s192 = scalar_lea.vmem %s2, %s191
        $region28: #{tpu_custom_call.1} parent=15 // pred_fallthru
          _
      $region16: #{tpu_custom_call.1} parent=5 // pred_fallthru
        _
      %p193 = scmp.le.s32.totalorder 1, %s12
      %p194 = scmp.lt.s32.totalorder %s12, 3
      %p195 = pnand %p193, %p194
      %p196 = pneg %p195
      // Predicated region
      $region29: #{tpu_custom_call.1} parent=5 // pred_check
        _
      $region30: #{tpu_custom_call.1} parent=5 // pred_check_branch
        %198 = sbr.rel (%p195) target = $region32
      $region31: #{tpu_custom_call.1} parent=5 // pred_region
        %s199 = ssub.s32 %s12, 1
        %p200 = scmp.lt.s32.totalorder %s22, 1
        %s201 = scalar_select %p200, %s22, 1
        %p202 = scmp.lt.s32.totalorder %s23, 0
        %s203 = scalar_select %p202, %s23, 0
        %s204 = sadd.s32 %s203, %s201
        %s205 = smul.addr %s204, 4
        %s206 = scalar_lea.vmem %s0, %s205
        %p207 = pneg %p59
        %p208 = pneg %p56
        %p209 = scmp.lt.s32.totalorder %s22, 1
        %s210 = scalar_select %p209, %s22, 1
        %p211 = scmp.lt.s32.totalorder %s24, 0
        %s212 = scalar_select %p211, %s24, 0
        %s213 = smul.addr %s210, 4
        %s214 = sadd.s32 %s212, %s213
        %s215 = smul.addr %s214, 4
        %s216 = scalar_lea.vmem %s1, %s215
        %p217 = pneg %p87
        %p218 = pneg %p84
        %p219 = scmp.lt.s32.totalorder %s22, 1
        %s220 = scalar_select %p219, %s22, 1
        %p221 = scmp.lt.s32.totalorder %s24, 0
        %s222 = scalar_select %p221, %s24, 0
        %s223 = sadd.s32 %s222, %s220
        %s224 = smul.addr %s223, 4
        %s225 = scalar_lea.vmem %s2, %s224
        %p226 = pneg %p115
        %p227 = pneg %p112
        %p228 = pneg %p143
        %p229 = pneg %p140
        %s230 = sand.u32 %s130, 1
        %s231 = scalar_lea.sflag [#allocation7], %s230
        %s232 = sand.u32 %s130, 1
        %s233 = smul.addr %s232, 8
        %s234 = scalar_lea.vmem [#allocation6], %s233
        %p235 = scmp.lt.s32.totalorder %s22, 1
        %s236 = scalar_select %p235, %s22, 1
        %p237 = scmp.lt.s32.totalorder %s23, 0
        %s238 = scalar_select %p237, %s23, 0
        %s239 = sadd.s32 %s238, %s236
        %s240 = smul.addr %s239, 4
        %s241 = scalar_lea.vmem %s0, %s240
        %p242 = scmp.lt.s32.totalorder %s22, 1
        %s243 = scalar_select %p242, %s22, 1
        %p244 = scmp.lt.s32.totalorder %s24, 0
        %s245 = scalar_select %p244, %s24, 0
        %s246 = smul.addr %s243, 4
        %s247 = sadd.s32 %s245, %s246
        %s248 = smul.addr %s247, 4
        %s249 = scalar_lea.vmem %s1, %s248
        %p250 = scmp.lt.s32.totalorder %s22, 1
        %s251 = scalar_select %p250, %s22, 1
        %p252 = scmp.lt.s32.totalorder %s24, 0
        %s253 = scalar_select %p252, %s24, 0
        %s254 = sadd.s32 %s253, %s251
        %s255 = smul.addr %s254, 4
        %s256 = scalar_lea.vmem %s2, %s255
        %p258 = scmp.eq.s32.totalorder %s24, 0
        // Predicated region
        $region33: #{tpu_custom_call.1} parent=31 // pred_check
          %p259 = pneg %p258
        $region34: #{tpu_custom_call.1} parent=31 // pred_check_branch
          %261 = sbr.rel (%p259) target = $region36
        $region35: #{tpu_custom_call.1} parent=31 // pred_region
          %v262 = vld [vmem:[%s241] sm:$0xf]
          %v263 = vunpack.c.l.bf16 %v262
          %v264 = vmul.f32 %v263, 0.17675781
          %v265 = vpack.c.bf16 %v264, %v264
          %vm266 = vcmask 257024
          %267 = vst.msk [vmem:[#allocation2] sm:$0xf] %vm266, %v265
          %268 = vst [vmem:[#allocation3] sm:$0xff] -inf
          %269 = vst [vmem:[#allocation4] sm:$0xff] 0.0
          %vm270 = vcmask 261120
          %271 = vst.msk [vmem:[#allocation5] sm:$0xff] %vm270, 0.0
        $region36: #{tpu_custom_call.1} parent=31 // pred_fallthru
          _
        %v272 = vld [vmem:[#allocation2] sm:$0xf]
        %v273 = vld [vmem:[%s249] sm:$0xf]
        %v274 = vld [vmem:[%s249 + $0x4] sm:$0xf]
        %v275 = vld [vmem:[%s249 + $0x8] sm:$0xf]
        %v276 = vld [vmem:[%s249 + $0xc] sm:$0xf]
        %v277 = vld [vmem:[%s256] sm:$0xf]
        %v282 = vunpack.c.l.b16 %v273
        %v283 = vunpack.c.l.b16 %v274
        %v284 = vunpack.c.l.b16 %v275
        %v285 = vunpack.c.l.b16 %v276
        %v286 = vpack.c.b16 %v283, %v282
        %v287 = vpack.c.b16 %v285, %v284
        %vm290 = vcmask 261120
        %v292 = vsel %vm290, %v272, 0
        %294 = vmatpush.bf16.msra.mxu0 0
        %295 = vmatpush.bf16.msra.mxu0 0
        %296 = vmatpush.bf16.msra.mxu0 0
        %297 = vmatpush.bf16.msra.mxu0 0
        %298 = vmatpush.bf16.msra.mxu0 0
        %299 = vmatpush.bf16.msra.mxu0 0
        %300 = vmatpush.bf16.msra.mxu0 %v287
        %301 = vmatpush.bf16.msra.mxu0 %v286
        %302 = vmatmul.bf16.gmra.mxu0 %v292
        %v303 = vpop.f32.mrf.mxu0
        %v304 = vadd.f32 0.0, %v303
        %v305 = vpop.f32.mrf.mxu0
        %306 = vdwg.mxu0
        %v307 = vld [vmem:[#allocation3] sm:$0xff]
        %v308 = vld [vmem:[#allocation4] sm:$0xff]
        %vm309 = vcmask 64512
        %v310 = vsel %vm309, %v304, -inf
        %311 = vmax.xlane.f32.xlu0 %v310
        %v312 = vpop.xlane.xlu0 %311
        %v313 = vmax.f32 %v307, %v312
        %v314 = vsub.f32 %v307, %v313
        %v315 = vmul.f32 %v314, 1.442695
        %v316 = vpow.pop %v315
        %318 = vset.pattern.permute.xlu0 0
        %319 = vperm.xlu0 %318, %v313
        %v320 = vpop.permute.xlu0 %319
        %v322 = vsub.f32 %v304, %v320
        %v323 = vmul.f32 %v322, 1.442695
        %v324 = vpow.pop %v323
        %v325 = vmul.f32 %v316, %v308
        %v326 = vsel %vm309, %v324, 0.0
        %327 = vadd.xlane.f32.xlu0 %v326
        %v328 = vpop.xlane.xlu0 %327
        %v329 = vadd.f32 %v325, %v328
        %330 = vst [vmem:[#allocation4] sm:$0xff] %v329
        %331 = vst [vmem:[#allocation3] sm:$0xff] %v313
        %v332 = vld [vmem:[#allocation5] sm:$0xff]
        %334 = vset.pattern.permute.xlu0 0
        %335 = vperm.xlu0 %334, %v316
        %v336 = vpop.permute.xlu0 %335
        %v338 = vmul.f32 %v332, %v336
        %v339 = vpack.c.bf16 %v324, %v324
        %v341 = vsel %vm309, %v339, 0
        %vm343 = vcmask 1043456
        %v345 = vsel %vm343, %v277, 0
        %347 = vmatpush.bf16.msra.mxu0 0
        %348 = vmatpush.bf16.msra.mxu0 0
        %349 = vmatpush.bf16.msra.mxu0 0
        %350 = vmatpush.bf16.msra.mxu0 0
        %351 = vmatpush.bf16.msra.mxu0 0
        %352 = vmatpush.bf16.msra.mxu0 0
        %353 = vmatpush.bf16.msra.mxu0 0
        %354 = vmatpush.bf16.msra.mxu0 %v345
        %355 = vmatmul.bf16.gmra.mxu0 %v341
        %v356 = vpop.f32.mrf.mxu0
        %v357 = vadd.f32 0.0, %v356
        %v358 = vpop.f32.mrf.mxu0
        %359 = vdwg.mxu0
        %v360 = vadd.f32 %v338, %v357
        %361 = vst.msk [vmem:[#allocation5] sm:$0xff] %vm290, %v360
        // Predicated region
        $region37: #{tpu_custom_call.1} parent=31 // pred_check
          %p362 = pneg %p258
        $region38: #{tpu_custom_call.1} parent=31 // pred_check_branch
          %364 = sbr.rel (%p362) target = $region40
        $region39: #{tpu_custom_call.1} parent=31 // pred_region
          %v365 = vld [vmem:[#allocation4] sm:$0xff]
          %v366 = vrcp.pop %v365
          %v367 = vld [vmem:[#allocation5] sm:$0xff]
          %369 = vset.pattern.permute.xlu0 0
          %370 = vperm.xlu0 %369, %v366
          %v371 = vpop.permute.xlu0 %370
          %v373 = vmul.f32 %v367, %v371
          %374 = vst.msk [vmem:[%s234] sm:$0xff] %vm290, %v373
        $region40: #{tpu_custom_call.1} parent=31 // pred_fallthru
          _
        %s375 = sand.u32 %s130, 1
        %s376 = scalar_lea.sflag [#allocation7], %s375
        %s377 = sand.u32 %s130, 1
        %s378 = smul.addr %s377, 8
        %s379 = scalar_lea.vmem [#allocation6], %s378
        // Predicated region
        $region41: #{tpu_custom_call.1} parent=31 // pred_check
          %p380 = pneg %p140
        $region42: #{tpu_custom_call.1} parent=31 // pred_check_branch
          %382 = sbr.rel (%p380) target = $region44
        $region43: #{tpu_custom_call.1} parent=31 // pred_region
          %384 = vsyncadd %s376, 0
          %s385 = sadd.s32 %s23, %s22
          %s386 = smul.addr %s385, 8
          %s387 = scalar_lea.hbm %s3, %s386
          %s389 = sshll.u32 %s379, 4
          %s390 = int_to_ptr.vmem [resolvable:$true] %s389
          %s391 = sshll.u32 %s387, 4
          %s392 = int_to_ptr.hbm [resolvable:$true] %s391
          %394 = dma.vmem_to_hbm [thread:$0]  %s390, 128, %s392, %s376
        $region44: #{tpu_custom_call.1} parent=31 // pred_fallthru
          _
      $region32: #{tpu_custom_call.1} parent=5 // pred_fallthru
        _
      %p395 = scmp.le.s32.totalorder 2, %s12
      // Predicated region
      $region45: #{tpu_custom_call.1} parent=5 // pred_check
        %p396 = pneg %p395
      $region46: #{tpu_custom_call.1} parent=5 // pred_check_branch
        %398 = sbr.rel (%p396) target = $region48
      $region47: #{tpu_custom_call.1} parent=5 // pred_region
        %s399 = ssub.s32 %s12, 2
        // Predicated region
        $region49: #{tpu_custom_call.1} parent=47 // pred_check
          %p400 = pneg %p146
        $region50: #{tpu_custom_call.1} parent=47 // pred_check_branch
          %402 = sbr.rel (%p400) target = $region52
        $region51: #{tpu_custom_call.1} parent=47 // pred_region
          %s403 = sand.u32 %s131, 1
          %s404 = scalar_lea.sflag [#allocation7], %s403
          %s405 = sand.u32 %s131, 1
          %s406 = smul.addr %s405, 8
          %s407 = scalar_lea.vmem [#allocation6], %s406
          %409 = dma.done %s404, 128
        $region52: #{tpu_custom_call.1} parent=47 // pred_fallthru
          _
      $region48: #{tpu_custom_call.1} parent=5 // pred_fallthru
        _
    $region6: #{tpu_custom_call.1} parent=1 // loop_footer
      %s16 = sadd.s32 1, %s12
    $region7: #{tpu_custom_call.1} parent=1 // loop_footer_branch
      %11 = sbr.rel target = $region3
    $region8: #{tpu_custom_call.1} parent=1 // loop_exit
      _
    %410 = vsyncpa [#allocation7], 1
    %s411 = scalar_lea.sflag [#allocation7], 1
    %412 = vsyncpa %s411, 1

</llo_original>
